<compile_context>
chip_gen: v7x
topology: tpu7x:2x2x1
jax: 0.10.0
libtpu: 0.0.40
codegen_flags: <defaults>
</compile_context>

<pallas_src>
import functools

import jax
import jax.numpy as jnp
from jax.experimental import pallas as pl
from jax.experimental.pallas import tpu as pltpu


def _round_up(v, m):
    return (v + m - 1) // m * m


def _round_down(v, m):
    return (v // m) * m


def _vmem_capacity_bytes():
    try:
        return int(pltpu.get_tpu_info().vmem_capacity_bytes)
    except Exception:
        return 64 << 20  # conservative fallback (v7x per-TensorCore VMEM)


def _partial_spatial_sum(x_ref, step, hw, t_hw):
    """f32 partial sum over the spatial (lane) axis of one (tb, tc, t_hw) block."""
    x = x_ref[...]  # keep input dtype; no f32 copy of the whole tile
    if hw % t_hw != 0:
        # Mask out-of-range lanes of the trailing partial spatial chunk.
        # Broadcast a (1, 1, t_hw) iota (cheap), and keep the select on x (NOT
        # on the ones operand) so uninitialized padding never hits the MXU.
        lane = jax.lax.broadcasted_iota(jnp.int32, (1, 1, t_hw), 2)
        x = jnp.where(step * t_hw + lane < hw, x, jnp.zeros_like(x))
    # Partial spatial sum on the MXU: batched ones-dot with f32 accumulation.
    ones = jnp.ones((x.shape[0], 1, x.shape[2]), dtype=x.dtype)        # (tb,1,t_hw)
    part = jnp.einsum("bks,bcs->bkc", ones, x,
                      preferred_element_type=jnp.float32)              # (tb,1,tc)
    return part[:, 0, :]                                               # (tb,tc)


def _se_fused_kernel(x_ref, w1_ref, w2_ref, o_ref, acc_ref, *, hw, t_hw, inv_hw):
    # x_ref: (tb, c, t_hw); w1_ref: (c, mip); w2_ref: (mip, c)
    # o_ref: (tb, c); acc_ref: (tb, c) f32, resident across the spatial axis.
    s = pl.program_id(1)

    @pl.when(s == 0)
    def _init():
        acc_ref[...] = jnp.zeros_like(acc_ref)

    acc_ref[...] += _partial_spatial_sum(x_ref, s, hw, t_hw)

    @pl.when(s == pl.num_programs(1) - 1)
    def _finalize():
        y = acc_ref[...] * inv_hw                                      # (tb, c) mean
        h = jnp.maximum(
            jnp.dot(y, w1_ref[...], preferred_element_type=jnp.float32), 0.0)
        z = jnp.dot(h, w2_ref[...], preferred_element_type=jnp.float32)
        o_ref[...] = jax.nn.sigmoid(z).astype(o_ref.dtype)


def _se_mean_kernel(x_ref, o_ref, acc_ref, *, hw, t_hw, inv_hw):
    # Channel-tiled reduction: x_ref (tb, tc, t_hw) -> o_ref (tb, tc) f32 means.
    s = pl.program_id(2)

    @pl.when(s == 0)
    def _init():
        acc_ref[...] = jnp.zeros_like(acc_ref)

    acc_ref[...] += _partial_spatial_sum(x_ref, s, hw, t_hw)

    @pl.when(s == pl.num_programs(2) - 1)
    def _finalize():
        o_ref[...] = (acc_ref[...] * inv_hw).astype(o_ref.dtype)


def _se_mlp_kernel(y_ref, w1_ref, w2_ref, o_ref):
    # Tiny MLP head on the (b, c) means: Linear -> ReLU -> Linear -> Sigmoid.
    h = jnp.maximum(
        jnp.dot(y_ref[...], w1_ref[...], preferred_element_type=jnp.float32), 0.0)
    z = jnp.dot(h, w2_ref[...], preferred_element_type=jnp.float32)
    o_ref[...] = jax.nn.sigmoid(z).astype(o_ref.dtype)


def _plan_tiles(b, c, hw, itemsize, blk_cap):
    """Choose (tb, tc, t_hw) so each x block ~= blk_cap (soft), the spatial lane
    axis stays long/contiguous, and big inputs expose >= 2 parallel programs."""
    tb = b if b <= 8 else 8        # leading dim of the 3-D x block: no alignment
    n_b = pl.cdiv(b, tb)           # constraint; partial trailing batch block is
                                   # dropped by the masked output writeback.
    hw_al = _round_down(hw, 128)   # largest 128-aligned spatial tile <= hw
    c_al = _round_down(c, 128)

    def p1(t_hw):
        return dict(fused=True, tb=tb, tc=c, t_hw=t_hw,
                    n_b=n_b, n_c=1, n_s=pl.cdiv(hw, t_hw))

    def p2(tc, t_hw):
        return dict(fused=False, tb=tb, tc=tc, t_hw=t_hw,
                    n_b=n_b, n_c=pl.cdiv(c, tc), n_s=pl.cdiv(hw, t_hw))

    if tb * c * hw * itemsize <= blk_cap:
        plan = p1(hw)                       # n_s == 1: fully contiguous block DMA
    elif hw_al >= 128 and tb * c * min(512, hw_al) * itemsize <= blk_cap:
        # Full channels, chunked spatial; largest 128-aligned tile under the cap.
        t_hw = max(128, min(hw_al, _round_down(blk_cap // (tb * c * itemsize), 128)))
        plan = p1(t_hw)
    elif c_al >= 128:
        # Large c: tile channels too (lane-dense 128-multiples for the means
        # output); the MLP is hoisted out of the reduction kernel.
        t_hw = min(hw_al, 1024) if hw_al >= 128 else hw
        tc = max(128, min(c_al, _round_down(blk_cap // (tb * t_hw * itemsize), 128)))
        plan = p2(tc, t_hw)
    else:
        t_hw = hw if hw_al < 128 else max(
            128, min(hw_al, _round_down(blk_cap // (tb * c * itemsize), 128)))
        plan = p1(t_hw)

    # v7x dual-TC: big inputs that landed on a single (batch x channel) program
    # only have the sequential spatial axis; split channels to get >= 2 parallel
    # programs (costs one extra micro MLP launch, negligible at this size).
    if (plan["n_b"] * plan["n_c"] == 1 and plan["n_s"] > 1 and c_al >= 256
            and b * c * hw * itemsize >= (8 << 20)):
        tc = max(128, _round_down(c // 2, 128))
        t_hw = min(hw_al, max(512, _round_down(blk_cap // (tb * tc * itemsize), 128)))
        plan = p2(tc, t_hw)
    return plan


def se_layer(x, w1, w2, *, max_block_bytes=None):
    """SELayer forward.  x: (b, c, h, w) NCHW; w1: (c, mip); w2: (mip, c).

    Returns the sigmoid gate with shape (b, c, 1, 1) (matching the PyTorch
    module, which returns the gate rather than x * gate).
    """
    b, c, h, w = x.shape
    hw = h * w
    itemsize = jnp.dtype(x.dtype).itemsize
    w_itemsize = jnp.dtype(w1.dtype).itemsize
    mip = w1.shape[1]
    inv_hw = 1.0 / float(hw)

    vmem_cap = _vmem_capacity_bytes()
    # Per-block x budget: ~16 MiB on 128-MiB-VMEM parts (v5e/v6e), ~4 MiB on
    # 64-MiB parts (v7x): big enough to amortize per-step overhead, small
    # enough that double-buffering stays well inside VMEM.
    blk_cap = (16 << 20) if vmem_cap >= (96 << 20) else (4 << 20)
    if max_block_bytes is not None:
        blk_cap = int(max_block_bytes)

    plan = _plan_tiles(b, c, hw, itemsize, blk_cap)
    tb, tc, t_hw = plan["tb"], plan["tc"], plan["t_hw"]
    n_b, n_c, n_s = plan["n_b"], plan["n_c"], plan["n_s"]
    fused = plan["fused"]

    x_flat = x.reshape(b, c, hw)

    # vmem_limit derived from the actual resident buffers (+headroom), capped
    # against the detected capacity (64 MiB/TC on v7x, 128 MiB on v5e/v6e).
    x_blk = tb * tc * t_hw * itemsize
    out_blk = tb * (c if fused else tc) * (itemsize if fused else 4)
    acc_blk = tb * (c if fused else tc) * 4
    w_blk = (2 * (2 * c * mip) * w_itemsize) if fused else 0
    resident = 2 * x_blk + 2 * out_blk + acc_blk + w_blk
    vmem_limit = min(max(2 * resident, 32 << 20),
                     max((vmem_cap * 3) // 4, resident + (4 << 20)))

    cost = pl.CostEstimate(
        flops=2 * b * c * hw + 4 * b * c * mip,
        transcendentals=b * c,
        bytes_accessed=b * c * hw * itemsize + 2 * c * mip * w_itemsize
        + b * c * itemsize,
    )

    if fused:
        kernel = functools.partial(_se_fused_kernel, hw=hw, t_hw=t_hw, inv_hw=inv_hw)
        gate = pl.pallas_call(
            kernel,
            out_shape=jax.ShapeDtypeStruct((b, c), x.dtype),
            grid_spec=pltpu.PrefetchScalarGridSpec(
                num_scalar_prefetch=0,
                grid=(n_b, n_s),
                in_specs=[
                    pl.BlockSpec((tb, c, t_hw), lambda i, s: (i, 0, s)),
                    pl.BlockSpec(w1.shape, lambda i, s: (0, 0)),  # fetched once, resident
                    pl.BlockSpec(w2.shape, lambda i, s: (0, 0)),  # fetched once, resident
                ],
                out_specs=pl.BlockSpec((tb, c), lambda i, s: (i, 0)),
                scratch_shapes=[pltpu.VMEM((tb, c), jnp.float32)],
            ),
            compiler_params=pltpu.CompilerParams(
                dimension_semantics=("parallel", "arbitrary"),
                vmem_limit_bytes=vmem_limit,
            ),
            cost_estimate=cost,
        )(x_flat, w1, w2)
    else:
        kernel = functools.partial(_se_mean_kernel, hw=hw, t_hw=t_hw, inv_hw=inv_hw)
        means = pl.pallas_call(
            kernel,
            out_shape=jax.ShapeDtypeStruct((b, c), jnp.float32),
            grid_spec=pltpu.PrefetchScalarGridSpec(
                num_scalar_prefetch=0,
                grid=(n_b, n_c, n_s),
                in_specs=[pl.BlockSpec((tb, tc, t_hw), lambda i, j, s: (i, j, s))],
                out_specs=pl.BlockSpec((tb, tc), lambda i, j, s: (i, j)),
                scratch_shapes=[pltpu.VMEM((tb, tc), jnp.float32)],
            ),
            compiler_params=pltpu.CompilerParams(
                dimension_semantics=("parallel", "parallel", "arbitrary"),
                vmem_limit_bytes=vmem_limit,
            ),
            cost_estimate=cost,
        )(x_flat)
        # Micro kernel for the tiny MLP head (whole arrays as single VMEM blocks).
        gate = pl.pallas_call(
            _se_mlp_kernel,
            out_shape=jax.ShapeDtypeStruct((b, c), x.dtype),
        )(means, w1, w2)

    return gate.reshape(b, c, 1, 1)


def init_se_params(key, channel, reduction=32, dtype=jnp.float32):
    """Deterministic init matching nn.Linear's default (kaiming-uniform-ish)."""
    mip = max(8, channel // reduction)
    k1, k2 = jax.random.split(key)
    bound1 = 1.0 / (channel ** 0.5)
    bound2 = 1.0 / (mip ** 0.5)
    # stored as (in_features, out_features) so the kernel computes y @ W
    w1 = jax.random.uniform(k1, (channel, mip), dtype, minval=-bound1, maxval=bound1)
    w2 = jax.random.uniform(k2, (mip, channel), dtype, minval=-bound2, maxval=bound2)
    return w1, w2


def se_layer_ref(x, w1, w2):
    """Pure-JAX reference for correctness check."""
    b, c = x.shape[:2]
    y = jnp.mean(x, axis=(2, 3))
    h = jnp.maximum(y @ w1, 0.0)
    z = jax.nn.sigmoid(h @ w2)
    return z.reshape(b, c, 1, 1)


if __name__ == "__main__":
    key = jax.random.PRNGKey(0)
    kx1, kp1, kx2, kx3, kp3 = jax.random.split(key, 5)

    # Case 1: module-default small shape -> fused path, n_s == 1 contiguous DMA.
    b, c, h, w = 2, 4, 16, 16          # channel=4, reduction=32 -> mip = max(8, 0) = 8
    x = jax.random.normal(kx1, (b, c, h, w), dtype=jnp.float32)
    w1, w2 = init_se_params(kp1, channel=c, reduction=32)
    out = jax.block_until_ready(se_layer(x, w1, w2))
    ref = se_layer_ref(x, w1, w2)
    assert out.shape == (b, c, 1, 1)
    assert jnp.allclose(out, ref, atol=1e-5, rtol=1e-5)

    # Case 2: force the chunked-spatial fused path (multi-step acc + tail mask).
    b2, c2, h2, w2_ = 2, 8, 48, 48
    x2 = jax.random.normal(kx2, (b2, c2, h2, w2_), dtype=jnp.float32)
    w1b, w2b = init_se_params(kp1, channel=c2, reduction=32)
    out2 = jax.block_until_ready(se_layer(x2, w1b, w2b, max_block_bytes=64 * 1024))
    assert jnp.allclose(out2, se_layer_ref(x2, w1b, w2b), atol=1e-5, rtol=1e-5)

    # Case 3: force the channel-tiled path (means kernel + hoisted MLP kernel).
    b3, c3, h3, w3_ = 2, 1024, 30, 30
    x3 = jax.random.normal(kx3, (b3, c3, h3, w3_), dtype=jnp.float32)
    w1c, w2c = init_se_params(kp3, channel=c3, reduction=32)
    out3 = jax.block_until_ready(se_layer(x3, w1c, w2c, max_block_bytes=1 << 20))
    assert jnp.allclose(out3, se_layer_ref(x3, w1c, w2c), atol=1e-5, rtol=1e-5)

    print("KERNEL_OK")
</pallas_src>

<mosaic_0001>
module attributes {stable_mosaic.version = 11 : i64} {
  func.func @_se_fused_kernel(%arg0: i32, %arg1: i32, %arg2: memref<2x4x256xf32, #tpu.memory_space<vmem>>, %arg3: memref<4x8xf32, #tpu.memory_space<vmem>>, %arg4: memref<8x4xf32, #tpu.memory_space<vmem>>, %arg5: memref<2x4xf32, #tpu.memory_space<vmem>>, %arg6: memref<2x4xf32, #tpu.memory_space<vmem>>) attributes {dimension_semantics = [#tpu.dimension_semantics<parallel>, #tpu.dimension_semantics<arbitrary>], iteration_bounds = array<i64: 1, 1>, scalar_prefetch = 0 : i64, scratch_operands = 1 : i64, tpu.core_type = #tpu.core_type<tc>, window_params = [{transform_indices = @transform_0, window_bounds = array<i64: 2, 4, 256>}, {pipeline_mode = #tpu.pipeline_mode<synchronous>, transform_indices = @transform_1, window_bounds = array<i64: 4, 8>}, {pipeline_mode = #tpu.pipeline_mode<synchronous>, transform_indices = @transform_2, window_bounds = array<i64: 8, 4>}, {transform_indices = @transform_3, window_bounds = array<i64: 2, 4>}]} {
    %c0_i32 = arith.constant 0 : i32
    %0 = arith.cmpi eq, %arg1, %c0_i32 : i32
    %1 = arith.extui %0 : i1 to i32
    %c0_i32_0 = arith.constant 0 : i32
    %2 = arith.cmpi ne, %1, %c0_i32_0 : i32
    scf.if %2 {
      %cst_10 = arith.constant 0.000000e+00 : f32
      %13 = vector.broadcast %cst_10 : f32 to vector<2x4xf32>
      %c0_11 = arith.constant 0 : index
      %c0_12 = arith.constant 0 : index
      %14 = vector.load %arg6[%c0_11, %c0_12] : memref<2x4xf32, #tpu.memory_space<vmem>>, vector<2x4xf32>
      tpu.vector_store %arg6[%c0_11, %c0_12], %13 {strides = array<i32>} : memref<2x4xf32, #tpu.memory_space<vmem>>, vector<2x4xf32>,
    } else {
    }
    %c0 = arith.constant 0 : index
    %c0_1 = arith.constant 0 : index
    %3 = vector.load %arg6[%c0, %c0_1] : memref<2x4xf32, #tpu.memory_space<vmem>>, vector<2x4xf32>
    %c0_2 = arith.constant 0 : index
    %c0_3 = arith.constant 0 : index
    %c0_4 = arith.constant 0 : index
    %4 = vector.load %arg2[%c0_2, %c0_3, %c0_4] : memref<2x4x256xf32, #tpu.memory_space<vmem>>, vector<2x4x256xf32>
    %cst = arith.constant 1.000000e+00 : f32
    %5 = vector.broadcast %cst : f32 to vector<2x1x256xf32>
    "tpu.trace_start"() <{level = 10 : i32, message = "bks,bcs->bkc"}> : () -> ()
    %cst_5 = arith.constant dense<0.000000e+00> : vector<2x1x4xf32>
    %6 = tpu.matmul %5, %4, %cst_5 {dimension_numbers = #tpu.dot_dimension_numbers<[2], [2], [1], [1], [0, 0, 0, 1, 1, 1], [0], [0]>} : vector<2x1x256xf32>, vector<2x4x256xf32>, vector<2x1x4xf32> -> vector<2x1x4xf32>
    "tpu.trace_stop"() : () -> ()
    %7 = vector.shape_cast %6 : vector<2x1x4xf32> to vector<2x4xf32>
    %8 = arith.addf %3, %7 : vector<2x4xf32>
    %c0_6 = arith.constant 0 : index
    %c0_7 = arith.constant 0 : index
    %9 = vector.load %arg6[%c0_6, %c0_7] : memref<2x4xf32, #tpu.memory_space<vmem>>, vector<2x4xf32>
    tpu.vector_store %arg6[%c0_6, %c0_7], %8 {strides = array<i32>} : memref<2x4xf32, #tpu.memory_space<vmem>>, vector<2x4xf32>,
    %c0_i32_8 = arith.constant 0 : i32
    %10 = arith.cmpi eq, %arg1, %c0_i32_8 : i32
    %11 = arith.extui %10 : i1 to i32
    %c0_i32_9 = arith.constant 0 : i32
    %12 = arith.cmpi ne, %11, %c0_i32_9 : i32
    scf.if %12 {
      %c0_10 = arith.constant 0 : index
      %c0_11 = arith.constant 0 : index
      %13 = vector.load %arg6[%c0_10, %c0_11] : memref<2x4xf32, #tpu.memory_space<vmem>>, vector<2x4xf32>
      %cst_12 = arith.constant 3.906250e-03 : f32
      %14 = vector.broadcast %cst_12 : f32 to vector<2x4xf32>
      %15 = arith.mulf %13, %14 : vector<2x4xf32>
      %c0_13 = arith.constant 0 : index
      %c0_14 = arith.constant 0 : index
      %16 = vector.load %arg3[%c0_13, %c0_14] : memref<4x8xf32, #tpu.memory_space<vmem>>, vector<4x8xf32>
      %cst_15 = arith.constant dense<0.000000e+00> : vector<2x8xf32>
      %17 = tpu.matmul %15, %16, %cst_15 {dimension_numbers = #tpu.dot_dimension_numbers<[1], [0], [0], [1], [0, 0, 1, 1], [], []>} : vector<2x4xf32>, vector<4x8xf32>, vector<2x8xf32> -> vector<2x8xf32>
      %cst_16 = arith.constant 0.000000e+00 : f32
      %18 = vector.broadcast %cst_16 : f32 to vector<2x8xf32>
      %19 = arith.maximumf %17, %18 : vector<2x8xf32>
      %c0_17 = arith.constant 0 : index
      %c0_18 = arith.constant 0 : index
      %20 = vector.load %arg4[%c0_17, %c0_18] : memref<8x4xf32, #tpu.memory_space<vmem>>, vector<8x4xf32>
      %cst_19 = arith.constant dense<0.000000e+00> : vector<2x4xf32>
      %21 = tpu.matmul %19, %20, %cst_19 {dimension_numbers = #tpu.dot_dimension_numbers<[1], [0], [0], [1], [0, 0, 1, 1], [], []>} : vector<2x8xf32>, vector<8x4xf32>, vector<2x4xf32> -> vector<2x4xf32>
      %22 = arith.negf %21 : vector<2x4xf32>
      %23 = math.exp %22 : vector<2x4xf32>
      %cst_20 = arith.constant 1.000000e+00 : f32
      %24 = vector.broadcast %cst_20 : f32 to vector<2x4xf32>
      %25 = arith.addf %24, %23 : vector<2x4xf32>
      %26 = arith.divf %24, %25 : vector<2x4xf32>
      %c0_21 = arith.constant 0 : index
      %c0_22 = arith.constant 0 : index
      %27 = vector.load %arg5[%c0_21, %c0_22] : memref<2x4xf32, #tpu.memory_space<vmem>>, vector<2x4xf32>
      tpu.vector_store %arg5[%c0_21, %c0_22], %26 {strides = array<i32>} : memref<2x4xf32, #tpu.memory_space<vmem>>, vector<2x4xf32>,
    } else {
    }
    return
  }
  func.func @transform_0(%arg0: i32, %arg1: i32) -> (i32, i32, i32) {
    %c0_i32 = arith.constant 0 : i32
    %c0_i32_0 = arith.constant 0 : i32
    return %arg0, %c0_i32, %arg1 : i32, i32, i32
  }
  func.func @transform_1(%arg0: i32, %arg1: i32) -> (i32, i32) {
    %c0_i32 = arith.constant 0 : i32
    %c0_i32_0 = arith.constant 0 : i32
    %c0_i32_1 = arith.constant 0 : i32
    return %c0_i32, %c0_i32_0 : i32, i32
  }
  func.func @transform_2(%arg0: i32, %arg1: i32) -> (i32, i32) {
    %c0_i32 = arith.constant 0 : i32
    %c0_i32_0 = arith.constant 0 : i32
    %c0_i32_1 = arith.constant 0 : i32
    return %c0_i32, %c0_i32_0 : i32, i32
  }
  func.func @transform_3(%arg0: i32, %arg1: i32) -> (i32, i32) {
    %c0_i32 = arith.constant 0 : i32
    %c0_i32_0 = arith.constant 0 : i32
    return %arg0, %c0_i32 : i32, i32
  }
}

</mosaic_0001>

<llo_original>
// kernel: tpu_custom_call.1
$region0: #{tpu_custom_call.1}
  #allocation0 [shape = 'u32[]', space=smem, size = 0x4, offset = 0x4, fixed_abs, tag = 'smem constant byte address 0x4 - core index']
  #allocation1 [shape = 'u32[144,128]{1,0:T(1,128)}', space=vmem, size = 0x12000, scoped, tag = 'internal scratch']
  #allocation2 [shape = 'f32[2,4]{1,0:T(2,128)}', space=vmem, size = 0x400, scoped, tag = 'scratch operand']
  %s0 = inlined_call_operand.hbm [shape: f32[2,4,256], index: 0, kind: input, shape index: {}]
  %s1 = inlined_call_operand.vmem [shape: f32[4,8], index: 1, kind: input, shape index: {}]
  %s2 = inlined_call_operand.vmem [shape: f32[8,4], index: 2, kind: input, shape index: {}]
  %s3 = inlined_call_operand.hbm [shape: f32[2,4], index: 3, kind: output, shape index: {}]
  %s4 = sld [smem:[#allocation0]]
  $region34: #{tpu_custom_call.1} parent=0
    _
  %s6 = ssub.s32 1, %s4
  %s7 = scalar_select 0, %s6, %s4
  $region1: #{tpu_custom_call.1} parent=0
    #allocation3 [shape = 'u8[8192]{0}', space=vmem, size = 0x2000, scoped, tag = 'input window, operand 0, single buffered']
    #allocation4 [shape = 's32[1]{0}', space=sflag, size = 0x4, scoped, tag = 'scoped memory for tpu_custom_call.1']
    #allocation5 [shape = 's32[1]{0}', space=sflag, size = 0x4, scoped, tag = 'scoped memory for tpu_custom_call.1']
    #allocation6 [shape = 'u8[1024]{0}', space=vmem, size = 0x400, scoped, tag = 'output window, operand 0, single buffered']
    %8 = vsyncpa [#allocation4], 0
    %9 = vsyncpa [#allocation5], 0
    // Predicated region
    $region2: #{tpu_custom_call.1} parent=1 // pred_check
      _
    $region3: #{tpu_custom_call.1} parent=1 // pred_check_branch
      %11 = sbr.rel (0) target = $region5
    $region4: #{tpu_custom_call.1} parent=1 // pred_region
      %s13 = ssub.s32 256, 256
      %14 = vsyncadd [#allocation4], %s13
      %s15 = sshll.u32 [#allocation3], 4
      %s16 = int_to_ptr.vmem [resolvable:$true] %s15
      %21 = dma.hbm_to_vmem [thread:$0]  %s0, 256, %s16, [#allocation4], 128, 128, 8
    $region5: #{tpu_custom_call.1} parent=1 // pred_fallthru
      _
    // Predicated region
    $region6: #{tpu_custom_call.1} parent=1 // pred_check
      _
    $region7: #{tpu_custom_call.1} parent=1 // pred_check_branch
      %23 = sbr.rel (0) target = $region9
    $region8: #{tpu_custom_call.1} parent=1 // pred_region
      _
    $region9: #{tpu_custom_call.1} parent=1 // pred_fallthru
      _
    // Predicated region
    $region10: #{tpu_custom_call.1} parent=1 // pred_check
      _
    $region11: #{tpu_custom_call.1} parent=1 // pred_check_branch
      %25 = sbr.rel (0) target = $region13
    $region12: #{tpu_custom_call.1} parent=1 // pred_region
      _
    $region13: #{tpu_custom_call.1} parent=1 // pred_fallthru
      _
    // Predicated region
    $region14: #{tpu_custom_call.1} parent=1 // pred_check
      _
    $region15: #{tpu_custom_call.1} parent=1 // pred_check_branch
      %27 = sbr.rel (0) target = $region17
    $region16: #{tpu_custom_call.1} parent=1 // pred_region
      %28 = dma.done [#allocation4], 256
    $region17: #{tpu_custom_call.1} parent=1 // pred_fallthru
      _
    %p29 = scmp.eq.s32.totalorder 0, 0
    // Predicated region
    $region18: #{tpu_custom_call.1} parent=1 // pred_check
      %p30 = pneg %p29
    $region19: #{tpu_custom_call.1} parent=1 // pred_check_branch
      %32 = sbr.rel (%p30) target = $region21
    $region20: #{tpu_custom_call.1} parent=1 // pred_region
      %vm33 = vcmask 25600
      %34 = vst.msk [vmem:[#allocation2] sm:$0x3] %vm33, 0.0
    $region21: #{tpu_custom_call.1} parent=1 // pred_fallthru
      _
    %v35 = vld [vmem:[#allocation2] sm:$0x3]
    %v36 = vld [vmem:[#allocation3] sm:$0xff]
    %v37 = vld [vmem:[#allocation3 + $0x8] sm:$0xff]
    %v39 = vcombine.high %v36, %v36
    %41 = vmatprep.subr.mxu0 %v39
    %42 = vmatpush1.xpose.msra.mxu0 %v36
    %43 = vmatprep.subr.mxu0 0.0
    %44 = vmatpush1.xpose.msra.mxu0 0.0
    %45 = vmatprep.subr.mxu0 0.0
    %46 = vmatpush1.xpose.msra.mxu0 0.0
    %47 = vmatprep.subr.mxu0 0.0
    %48 = vmatpush1.xpose.msra.mxu0 0.0
    %49 = vmatprep.subr.mxu0 0.0
    %50 = vmatpush1.xpose.msra.mxu0 0.0
    %51 = vmatprep.subr.mxu0 0.0
    %52 = vmatpush1.xpose.msra.mxu0 0.0
    %53 = vmatprep.subr.mxu0 0.0
    %54 = vmatpush1.xpose.msra.mxu0 0.0
    %55 = vmatprep.subr.mxu0 0.0
    %56 = vmatpush1.xpose.msra.mxu0 0.0
    %57 = vmatprep.subr.mxu0 0.0
    %58 = vmatpush1.xpose.msra.mxu0 0.0
    %59 = vmatprep.subr.mxu0 0.0
    %60 = vmatpush1.xpose.msra.mxu0 0.0
    %61 = vmatprep.subr.mxu0 0.0
    %62 = vmatpush1.xpose.msra.mxu0 0.0
    %63 = vmatprep.subr.mxu0 0.0
    %64 = vmatpush1.xpose.msra.mxu0 0.0
    %65 = vmatprep.subr.mxu0 0.0
    %66 = vmatpush1.xpose.msra.mxu0 0.0
    %67 = vmatprep.subr.mxu0 0.0
    %68 = vmatpush1.xpose.msra.mxu0 0.0
    %69 = vmatprep.subr.mxu0 0.0
    %70 = vmatpush1.xpose.msra.mxu0 0.0
    %71 = vmatprep.subr.mxu0 0.0
    %72 = vmatpush1.xpose.msra.mxu0 0.0
    %73 = vmatprep.subr.mxu0 0.0
    %74 = vmatpush1.xpose.msra.mxu0 0.0
    %75 = vmatprep.subr.mxu0 0.0
    %76 = vmatpush1.xpose.msra.mxu0 0.0
    %77 = vmatprep.subr.mxu0 0.0
    %78 = vmatpush1.xpose.msra.mxu0 0.0
    %79 = vmatprep.subr.mxu0 0.0
    %80 = vmatpush1.xpose.msra.mxu0 0.0
    %81 = vmatprep.subr.mxu0 0.0
    %82 = vmatpush1.xpose.msra.mxu0 0.0
    %83 = vmatprep.subr.mxu0 0.0
    %84 = vmatpush1.xpose.msra.mxu0 0.0
    %85 = vmatprep.subr.mxu0 0.0
    %86 = vmatpush1.xpose.msra.mxu0 0.0
    %87 = vmatprep.subr.mxu0 0.0
    %88 = vmatpush1.xpose.msra.mxu0 0.0
    %89 = vmatprep.subr.mxu0 0.0
    %90 = vmatpush1.xpose.msra.mxu0 0.0
    %91 = vmatprep.subr.mxu0 0.0
    %92 = vmatpush1.xpose.msra.mxu0 0.0
    %93 = vmatprep.subr.mxu0 0.0
    %94 = vmatpush1.xpose.msra.mxu0 0.0
    %95 = vmatprep.subr.mxu0 0.0
    %96 = vmatpush1.xpose.msra.mxu0 0.0
    %97 = vmatprep.subr.mxu0 0.0
    %98 = vmatpush1.xpose.msra.mxu0 0.0
    %99 = vmatprep.subr.mxu0 0.0
    %100 = vmatpush1.xpose.msra.mxu0 0.0
    %101 = vmatprep.subr.mxu0 0.0
    %102 = vmatpush1.xpose.msra.mxu0 0.0
    %103 = vmatprep.subr.mxu0 0.0
    %104 = vmatpush1.xpose.msra.mxu0 0.0
    %105 = vmatprep.mubr.f32.mxu0 1.0
    %106 = vmatmul.mubr.f32.gmra.mrb[0].mxu0 1.0
    %v107 = vpop.f32.mrb[0].mxu0
    %v108 = vadd.f32 0.0, %v107
    %v109 = vpop.f32.mrb[0].mxu0
    %110 = vdwg.mxu0
    %v112 = vcombine.high %v37, %v37
    %114 = vmatprep.subr.mxu0 %v112
    %115 = vmatpush1.xpose.msra.mxu0 %v37
    %116 = vmatprep.subr.mxu0 0.0
    %117 = vmatpush1.xpose.msra.mxu0 0.0
    %118 = vmatprep.subr.mxu0 0.0
    %119 = vmatpush1.xpose.msra.mxu0 0.0
    %120 = vmatprep.subr.mxu0 0.0
    %121 = vmatpush1.xpose.msra.mxu0 0.0
    %122 = vmatprep.subr.mxu0 0.0
    %123 = vmatpush1.xpose.msra.mxu0 0.0
    %124 = vmatprep.subr.mxu0 0.0
    %125 = vmatpush1.xpose.msra.mxu0 0.0
    %126 = vmatprep.subr.mxu0 0.0
    %127 = vmatpush1.xpose.msra.mxu0 0.0
    %128 = vmatprep.subr.mxu0 0.0
    %129 = vmatpush1.xpose.msra.mxu0 0.0
    %130 = vmatprep.subr.mxu0 0.0
    %131 = vmatpush1.xpose.msra.mxu0 0.0
    %132 = vmatprep.subr.mxu0 0.0
    %133 = vmatpush1.xpose.msra.mxu0 0.0
    %134 = vmatprep.subr.mxu0 0.0
    %135 = vmatpush1.xpose.msra.mxu0 0.0
    %136 = vmatprep.subr.mxu0 0.0
    %137 = vmatpush1.xpose.msra.mxu0 0.0
    %138 = vmatprep.subr.mxu0 0.0
    %139 = vmatpush1.xpose.msra.mxu0 0.0
    %140 = vmatprep.subr.mxu0 0.0
    %141 = vmatpush1.xpose.msra.mxu0 0.0
    %142 = vmatprep.subr.mxu0 0.0
    %143 = vmatpush1.xpose.msra.mxu0 0.0
    %144 = vmatprep.subr.mxu0 0.0
    %145 = vmatpush1.xpose.msra.mxu0 0.0
    %146 = vmatprep.subr.mxu0 0.0
    %147 = vmatpush1.xpose.msra.mxu0 0.0
    %148 = vmatprep.subr.mxu0 0.0
    %149 = vmatpush1.xpose.msra.mxu0 0.0
    %150 = vmatprep.subr.mxu0 0.0
    %151 = vmatpush1.xpose.msra.mxu0 0.0
    %152 = vmatprep.subr.mxu0 0.0
    %153 = vmatpush1.xpose.msra.mxu0 0.0
    %154 = vmatprep.subr.mxu0 0.0
    %155 = vmatpush1.xpose.msra.mxu0 0.0
    %156 = vmatprep.subr.mxu0 0.0
    %157 = vmatpush1.xpose.msra.mxu0 0.0
    %158 = vmatprep.subr.mxu0 0.0
    %159 = vmatpush1.xpose.msra.mxu0 0.0
    %160 = vmatprep.subr.mxu0 0.0
    %161 = vmatpush1.xpose.msra.mxu0 0.0
    %162 = vmatprep.subr.mxu0 0.0
    %163 = vmatpush1.xpose.msra.mxu0 0.0
    %164 = vmatprep.subr.mxu0 0.0
    %165 = vmatpush1.xpose.msra.mxu0 0.0
    %166 = vmatprep.subr.mxu0 0.0
    %167 = vmatpush1.xpose.msra.mxu0 0.0
    %168 = vmatprep.subr.mxu0 0.0
    %169 = vmatpush1.xpose.msra.mxu0 0.0
    %170 = vmatprep.subr.mxu0 0.0
    %171 = vmatpush1.xpose.msra.mxu0 0.0
    %172 = vmatprep.subr.mxu0 0.0
    %173 = vmatpush1.xpose.msra.mxu0 0.0
    %174 = vmatprep.subr.mxu0 0.0
    %175 = vmatpush1.xpose.msra.mxu0 0.0
    %176 = vmatprep.subr.mxu0 0.0
    %177 = vmatpush1.xpose.msra.mxu0 0.0
    %178 = vmatprep.mubr.f32.mxu0 1.0
    %179 = vmatmul.mubr.f32.gmra.mrb[0].mxu0 1.0
    %v180 = vpop.f32.mrb[0].mxu0
    %v181 = vadd.f32 0.0, %v180
    %v182 = vpop.f32.mrb[0].mxu0
    %183 = vdwg.mxu0
    %v186 = vrot.slane %v181, 7
    %vm187 = vcmask 1041409
    %v188 = vsel %vm187, %v186, %v108
    %v190 = vadd.f32 %v35, %v188
    %vm191 = vcmask 25600
    %192 = vst.msk [vmem:[#allocation2] sm:$0x3] %vm191, %v190
    // Predicated region
    $region22: #{tpu_custom_call.1} parent=1 // pred_check
      %p193 = pneg %p29
    $region23: #{tpu_custom_call.1} parent=1 // pred_check_branch
      %195 = sbr.rel (%p193) target = $region25
    $region24: #{tpu_custom_call.1} parent=1 // pred_region
      %v196 = vld [vmem:[#allocation2] sm:$0x3]
      %v197 = vmul.f32 %v196, 0.00390625
      %v198 = vld [vmem:[%s1] sm:$0xf]
      %vm199 = vcmask 31744
      %v201 = vsel %vm199, %v197, 0
      %vm203 = vcmask 1043456
      %v205 = vsel %vm203, %v198, 0
      %207 = vmatprep.subr.mxu0 0.0
      %208 = vmatpush1.msra.mxu0 %v205
      %209 = vmatprep.subr.mxu0 0.0
      %210 = vmatpush1.msra.mxu0 0.0
      %211 = vmatprep.subr.mxu0 0.0
      %212 = vmatpush1.msra.mxu0 0.0
      %213 = vmatprep.subr.mxu0 0.0
      %214 = vmatpush1.msra.mxu0 0.0
      %215 = vmatprep.subr.mxu0 0.0
      %216 = vmatpush1.msra.mxu0 0.0
      %217 = vmatprep.subr.mxu0 0.0
      %218 = vmatpush1.msra.mxu0 0.0
      %219 = vmatprep.subr.mxu0 0.0
      %220 = vmatpush1.msra.mxu0 0.0
      %221 = vmatprep.subr.mxu0 0.0
      %222 = vmatpush1.msra.mxu0 0.0
      %223 = vmatprep.subr.mxu0 0.0
      %224 = vmatpush1.msra.mxu0 0.0
      %225 = vmatprep.subr.mxu0 0.0
      %226 = vmatpush1.msra.mxu0 0.0
      %227 = vmatprep.subr.mxu0 0.0
      %228 = vmatpush1.msra.mxu0 0.0
      %229 = vmatprep.subr.mxu0 0.0
      %230 = vmatpush1.msra.mxu0 0.0
      %231 = vmatprep.subr.mxu0 0.0
      %232 = vmatpush1.msra.mxu0 0.0
      %233 = vmatprep.subr.mxu0 0.0
      %234 = vmatpush1.msra.mxu0 0.0
      %235 = vmatprep.subr.mxu0 0.0
      %236 = vmatpush1.msra.mxu0 0.0
      %237 = vmatprep.subr.mxu0 0.0
      %238 = vmatpush1.msra.mxu0 0.0
      %239 = vmatprep.subr.mxu0 0.0
      %240 = vmatpush1.msra.mxu0 0.0
      %241 = vmatprep.subr.mxu0 0.0
      %242 = vmatpush1.msra.mxu0 0.0
      %243 = vmatprep.subr.mxu0 0.0
      %244 = vmatpush1.msra.mxu0 0.0
      %245 = vmatprep.subr.mxu0 0.0
      %246 = vmatpush1.msra.mxu0 0.0
      %247 = vmatprep.subr.mxu0 0.0
      %248 = vmatpush1.msra.mxu0 0.0
      %249 = vmatprep.subr.mxu0 0.0
      %250 = vmatpush1.msra.mxu0 0.0
      %251 = vmatprep.subr.mxu0 0.0
      %252 = vmatpush1.msra.mxu0 0.0
      %253 = vmatprep.subr.mxu0 0.0
      %254 = vmatpush1.msra.mxu0 0.0
      %255 = vmatprep.subr.mxu0 0.0
      %256 = vmatpush1.msra.mxu0 0.0
      %257 = vmatprep.subr.mxu0 0.0
      %258 = vmatpush1.msra.mxu0 0.0
      %259 = vmatprep.subr.mxu0 0.0
      %260 = vmatpush1.msra.mxu0 0.0
      %261 = vmatprep.subr.mxu0 0.0
      %262 = vmatpush1.msra.mxu0 0.0
      %263 = vmatprep.subr.mxu0 0.0
      %264 = vmatpush1.msra.mxu0 0.0
      %265 = vmatprep.subr.mxu0 0.0
      %266 = vmatpush1.msra.mxu0 0.0
      %267 = vmatprep.subr.mxu0 0.0
      %268 = vmatpush1.msra.mxu0 0.0
      %269 = vmatprep.subr.mxu0 0.0
      %270 = vmatpush1.msra.mxu0 0.0
      %271 = vmatprep.mubr.f32.mxu0 0.0
      %272 = vmatmul.mubr.f32.gmra.mrb[0].mxu0 %v201
      %v273 = vpop.f32.mrb[0].mxu0
      %v274 = vadd.f32 0.0, %v273
      %v275 = vpop.f32.mrb[0].mxu0
      %276 = vdwg.mxu0
      %v277 = vmax.f32 %v274, 0.0
      %v278 = vld [vmem:[%s2] sm:$0xff]
      %vm279 = vcmask 64512
      %v281 = vsel %vm279, %v277, 0
      %283 = vmatprep.subr.mxu0 0.0
      %284 = vmatpush1.msra.mxu0 %v278
      %285 = vmatprep.subr.mxu0 0.0
      %286 = vmatpush1.msra.mxu0 0.0
      %287 = vmatprep.subr.mxu0 0.0
      %288 = vmatpush1.msra.mxu0 0.0
      %289 = vmatprep.subr.mxu0 0.0
      %290 = vmatpush1.msra.mxu0 0.0
      %291 = vmatprep.subr.mxu0 0.0
      %292 = vmatpush1.msra.mxu0 0.0
      %293 = vmatprep.subr.mxu0 0.0
      %294 = vmatpush1.msra.mxu0 0.0
      %295 = vmatprep.subr.mxu0 0.0
      %296 = vmatpush1.msra.mxu0 0.0
      %297 = vmatprep.subr.mxu0 0.0
      %298 = vmatpush1.msra.mxu0 0.0
      %299 = vmatprep.subr.mxu0 0.0
      %300 = vmatpush1.msra.mxu0 0.0
      %301 = vmatprep.subr.mxu0 0.0
      %302 = vmatpush1.msra.mxu0 0.0
      %303 = vmatprep.subr.mxu0 0.0
      %304 = vmatpush1.msra.mxu0 0.0
      %305 = vmatprep.subr.mxu0 0.0
      %306 = vmatpush1.msra.mxu0 0.0
      %307 = vmatprep.subr.mxu0 0.0
      %308 = vmatpush1.msra.mxu0 0.0
      %309 = vmatprep.subr.mxu0 0.0
      %310 = vmatpush1.msra.mxu0 0.0
      %311 = vmatprep.subr.mxu0 0.0
      %312 = vmatpush1.msra.mxu0 0.0
      %313 = vmatprep.subr.mxu0 0.0
      %314 = vmatpush1.msra.mxu0 0.0
      %315 = vmatprep.subr.mxu0 0.0
      %316 = vmatpush1.msra.mxu0 0.0
      %317 = vmatprep.subr.mxu0 0.0
      %318 = vmatpush1.msra.mxu0 0.0
      %319 = vmatprep.subr.mxu0 0.0
      %320 = vmatpush1.msra.mxu0 0.0
      %321 = vmatprep.subr.mxu0 0.0
      %322 = vmatpush1.msra.mxu0 0.0
      %323 = vmatprep.subr.mxu0 0.0
      %324 = vmatpush1.msra.mxu0 0.0
      %325 = vmatprep.subr.mxu0 0.0
      %326 = vmatpush1.msra.mxu0 0.0
      %327 = vmatprep.subr.mxu0 0.0
      %328 = vmatpush1.msra.mxu0 0.0
      %329 = vmatprep.subr.mxu0 0.0
      %330 = vmatpush1.msra.mxu0 0.0
      %331 = vmatprep.subr.mxu0 0.0
      %332 = vmatpush1.msra.mxu0 0.0
      %333 = vmatprep.subr.mxu0 0.0
      %334 = vmatpush1.msra.mxu0 0.0
      %335 = vmatprep.subr.mxu0 0.0
      %336 = vmatpush1.msra.mxu0 0.0
      %337 = vmatprep.subr.mxu0 0.0
      %338 = vmatpush1.msra.mxu0 0.0
      %339 = vmatprep.subr.mxu0 0.0
      %340 = vmatpush1.msra.mxu0 0.0
      %341 = vmatprep.subr.mxu0 0.0
      %342 = vmatpush1.msra.mxu0 0.0
      %343 = vmatprep.subr.mxu0 0.0
      %344 = vmatpush1.msra.mxu0 0.0
      %345 = vmatprep.subr.mxu0 0.0
      %346 = vmatpush1.msra.mxu0 0.0
      %347 = vmatprep.mubr.f32.mxu0 0.0
      %348 = vmatmul.mubr.f32.gmra.mrb[0].mxu0 %v281
      %v349 = vpop.f32.mrb[0].mxu0
      %v350 = vadd.f32 0.0, %v349
      %v351 = vpop.f32.mrb[0].mxu0
      %352 = vdwg.mxu0
      %v353 = vxor.u32 %v350, 2147483648
      %v354 = vmul.f32 %v353, 1.442695
      %v355 = vpow.pop %v354
      %v356 = vadd.f32 %v355, 1.0
      %v357 = vrcp.pop %v356
      %v358 = vmul.f32 1.0, %v357
      %359 = vst.msk [vmem:[#allocation6] sm:$0x3] %vm191, %v358
    $region25: #{tpu_custom_call.1} parent=1 // pred_fallthru
      _
    // Predicated region
    $region26: #{tpu_custom_call.1} parent=1 // pred_check
      _
    $region27: #{tpu_custom_call.1} parent=1 // pred_check_branch
      %361 = sbr.rel (0) target = $region29
    $region28: #{tpu_custom_call.1} parent=1 // pred_region
      %s363 = ssub.s32 32, 32
      %364 = vsyncadd [#allocation5], %s363
      %s366 = sshll.u32 [#allocation6], 4
      %s367 = int_to_ptr.vmem [resolvable:$true] %s366
      %369 = dma.vmem_to_hbm [thread:$0]  %s367, 32, %s3, [#allocation5]
    $region29: #{tpu_custom_call.1} parent=1 // pred_fallthru
      _
    // Predicated region
    $region30: #{tpu_custom_call.1} parent=1 // pred_check
      _
    $region31: #{tpu_custom_call.1} parent=1 // pred_check_branch
      %371 = sbr.rel (0) target = $region33
    $region32: #{tpu_custom_call.1} parent=1 // pred_region
      %372 = dma.done [#allocation5], 32
    $region33: #{tpu_custom_call.1} parent=1 // pred_fallthru
      _
    %373 = vsyncpa [#allocation4], 1
    %374 = vsyncpa [#allocation5], 1

</llo_original>
